<compile_context>
chip_gen: v5e
topology: v5e:2x2
jax: 0.10.0
libtpu: 0.0.40
codegen_flags: <defaults>
</compile_context>

<pallas_src>
import functools

import jax
import jax.numpy as jnp
from jax.experimental import pallas as pl
from jax.experimental.pallas import tpu as pltpu

_LANE = 128
_SUBLANE_BF16 = 16


def _round_up(n, m):
    return ((n + m - 1) // m) * m


# ----------------------------- Pallas kernel --------------------------------
def _conv_bn_relu_kernel(x_ref, w_ref, b_ref, o_ref):
    # x_ref: (1, th, Wo, Kp)  bf16 packed conv patches for one output row-slab
    # w_ref: (Kp, Op)         bf16 conv weight with BN scale folded in (resident)
    # b_ref: (1, Op)          f32  folded BN bias (resident)
    # o_ref: (1, th, Wo, Op)  bf16 output row-slab (lane dense)
    _, th, wo, kp = x_ref.shape
    op = o_ref.shape[-1]
    xs = x_ref[0].reshape(th * wo, kp)      # contiguous merge (Wo % 16 == 0) -> free
    acc = jnp.dot(xs, w_ref[...], preferred_element_type=jnp.float32)   # MXU, f32 acc
    y = jnp.maximum(acc + b_ref[...], 0.0)  # f32 bias + ReLU epilogue (no zeroing pass)
    o_ref[0] = y.reshape(th, wo, op).astype(o_ref.dtype)


# ------------------------------ JAX wrapper ----------------------------------
@functools.partial(
    jax.jit, static_argnames=("kernel_size", "stride", "padding", "block_h"))
def conv_bn_relu(x, weight, gamma, beta, running_mean, running_var, *,
                 kernel_size=3, stride=1, padding=0, eps=1e-5, block_h=None):
    # x: (B, C_in, H, W) NCHW (PyTorch layout), weight: (C_out, C_in, k, k)
    B, C_in, H, W = x.shape
    C_out = weight.shape[0]
    k = kernel_size
    s = stride
    H_out = (H + 2 * padding - k) // s + 1
    W_out = (W + 2 * padding - k) // s + 1

    Kp = _round_up(k * k * C_in, _LANE)     # packed contraction dim, lane aligned
    Op = _round_up(C_out, _LANE)            # output lane dim -> unmasked stores
    Wo = _round_up(W_out, _SUBLANE_BF16)    # bf16 sublane-friendly output width

    # ---- pick the output row-slab so per-step VMEM stays bounded -----------
    if block_h is None:
        block_h = max(8, 2048 // Wo)        # target ~2k flattened rows per tile
    block_h = max(1, min(block_h, H_out))
    while block_h > 1 and block_h * Wo * (Kp * 2 + Op * 2 + Op * 4) > (8 << 20):
        block_h = (block_h + 1) // 2
    n_t = -(-H_out // block_h)              # cdiv
    H_op = n_t * block_h                    # padded output rows

    # ---- NCHW -> NHWC, spatial zero-pad (conv halo + tile padding), bf16 ---
    h_need = (H_op - 1) * s + k
    w_need = (Wo - 1) * s + k
    x_nhwc = jnp.transpose(x, (0, 2, 3, 1))
    x_pad = jnp.pad(
        x_nhwc,
        ((0, 0),
         (padding, max(0, h_need - H - padding)),
         (padding, max(0, w_need - W - padding)),
         (0, 0))).astype(jnp.bfloat16)

    # ---- pack the k*k*C_in taps onto the lane (contraction) axis -----------
    patches = [
        x_pad[:, kh:kh + (H_op - 1) * s + 1:s, kw:kw + (Wo - 1) * s + 1:s, :]
        for kh in range(k) for kw in range(k)
    ]
    x_pack = jnp.concatenate(patches, axis=-1)            # (B, H_op, Wo, k*k*C_in)
    x_pack = jnp.pad(x_pack, ((0, 0), (0, 0), (0, 0), (0, Kp - k * k * C_in)))

    # ---- fold BN scale into the conv weight; keep bias for the epilogue ----
    scale = (gamma / jnp.sqrt(running_var + eps)).astype(jnp.float32)
    bias = beta.astype(jnp.float32) - running_mean.astype(jnp.float32) * scale
    w_f = weight.astype(jnp.float32) * scale[:, None, None, None]       # (O, C, k, k)
    w_f = jnp.transpose(w_f, (2, 3, 1, 0)).reshape(k * k * C_in, C_out) # (kh,kw,c),O
    w_f = jnp.pad(w_f, ((0, Kp - k * k * C_in), (0, Op - C_out)))
    w_bf16 = w_f.astype(jnp.bfloat16)                                   # (Kp, Op)
    bias_p = jnp.pad(bias, (0, Op - C_out)).reshape(1, Op)              # (1, Op)

    # ---- explicit scoped-VMEM budget (double-buffered blocks + headroom) ---
    in_blk = block_h * Wo * Kp * 2
    out_blk = block_h * Wo * Op * 2
    acc_blk = block_h * Wo * Op * 4
    vmem_need = 2 * in_blk + 2 * out_blk + acc_blk + 2 * Kp * Op * 2 + Op * 4
    vmem_limit = int(min(max(2 * vmem_need, 16 << 20), 64 << 20))

    out = pl.pallas_call(
        _conv_bn_relu_kernel,
        out_shape=jax.ShapeDtypeStruct((B, H_op, Wo, Op), jnp.bfloat16),
        grid=(B, n_t),
        in_specs=[
            pl.BlockSpec((1, block_h, Wo, Kp), lambda b, t: (b, t, 0, 0)),
            pl.BlockSpec((Kp, Op), lambda b, t: (0, 0)),    # resident weight
            pl.BlockSpec((1, Op), lambda b, t: (0, 0)),     # resident bias
        ],
        out_specs=pl.BlockSpec((1, block_h, Wo, Op), lambda b, t: (b, t, 0, 0)),
        compiler_params=pltpu.CompilerParams(
            dimension_semantics=("parallel", "parallel"),   # batch x row-slab
            vmem_limit_bytes=vmem_limit,
        ),
    )(x_pack, w_bf16, bias_p)

    # Un-pad + back to NCHW to match the PyTorch module's API (single fused XLA
    # pass).  In a chained network the padded NHWC bf16 layout would be kept and
    # consumed directly by the next _ConvBNReLU block instead.
    out = out[:, :H_out, :W_out, :C_out]
    return jnp.transpose(out, (0, 3, 1, 2)).astype(jnp.float32)


# ------------------------------ reference -----------------------------------
def _reference(x, weight, gamma, beta, running_mean, running_var,
               *, stride=1, padding=1, eps=1e-5):
    y = jax.lax.conv_general_dilated(
        x, weight, window_strides=(stride, stride),
        padding=[(padding, padding), (padding, padding)],
        dimension_numbers=("NCHW", "OIHW", "NCHW"))
    scale = gamma / jnp.sqrt(running_var + eps)
    bias = beta - running_mean * scale
    y = y * scale[None, :, None, None] + bias[None, :, None, None]
    return jnp.maximum(y, 0.0)


# -------------------------------- main ---------------------------------------
if __name__ == "__main__":
    key = jax.random.PRNGKey(0)
    B, C_in, H, W = 2, 4, 16, 16
    C_out, k, stride, padding = 8, 3, 1, 1

    kx, kw_, kg, kb, km, kv = jax.random.split(key, 6)
    x = jax.random.normal(kx, (B, C_in, H, W), dtype=jnp.float32)
    weight = jax.random.normal(kw_, (C_out, C_in, k, k), dtype=jnp.float32) * 0.1
    gamma = jax.random.uniform(kg, (C_out,), minval=0.5, maxval=1.5)
    beta = jax.random.normal(kb, (C_out,)) * 0.1
    running_mean = jax.random.normal(km, (C_out,)) * 0.1
    running_var = jax.random.uniform(kv, (C_out,), minval=0.5, maxval=1.5)

    # block_h=8 -> grid (B=2, n_t=2): exercises the row-slab tiling path.
    out = conv_bn_relu(x, weight, gamma, beta, running_mean, running_var,
                       kernel_size=k, stride=stride, padding=padding, block_h=8)
    out = jax.block_until_ready(out)

    ref = _reference(x, weight, gamma, beta, running_mean, running_var,
                     stride=stride, padding=padding)
    assert out.shape == (B, C_out, H, W), out.shape
    # bf16 operands / bf16 kernel output (f32 accumulation) -> loose tolerance.
    max_err = float(jnp.max(jnp.abs(out - ref)))
    assert jnp.allclose(out, ref, atol=5e-2, rtol=5e-2), (
        f"mismatch vs reference; max abs err = {max_err}")

    print("KERNEL_OK")
</pallas_src>

<mosaic_0001>
module attributes {stable_mosaic.version = 11 : i64} {
  func.func @_conv_bn_relu_kernel(%arg0: i32, %arg1: i32, %arg2: memref<1x8x16x128xbf16, #tpu.memory_space<vmem>>, %arg3: memref<128x128xbf16, #tpu.memory_space<vmem>>, %arg4: memref<1x128xf32, #tpu.memory_space<vmem>>, %arg5: memref<1x8x16x128xbf16, #tpu.memory_space<vmem>>) attributes {dimension_semantics = [#tpu.dimension_semantics<parallel>, #tpu.dimension_semantics<parallel>], iteration_bounds = array<i64: 2, 2>, scalar_prefetch = 0 : i64, scratch_operands = 0 : i64, tpu.core_type = #tpu.core_type<tc>, window_params = [{transform_indices = @transform_0, window_bounds = array<i64: 1, 8, 16, 128>}, {pipeline_mode = #tpu.pipeline_mode<synchronous>, transform_indices = @transform_1, window_bounds = array<i64: 128, 128>}, {pipeline_mode = #tpu.pipeline_mode<synchronous>, transform_indices = @transform_2, window_bounds = array<i64: 1, 128>}, {transform_indices = @transform_3, window_bounds = array<i64: 1, 8, 16, 128>}]} {
    %c0 = arith.constant 0 : index
    %c0_0 = arith.constant 0 : index
    %c0_1 = arith.constant 0 : index
    %c0_2 = arith.constant 0 : index
    %0 = vector.load %arg2[%c0, %c0_0, %c0_1, %c0_2] : memref<1x8x16x128xbf16, #tpu.memory_space<vmem>>, vector<1x8x16x128xbf16>
    %1 = vector.shape_cast %0 : vector<1x8x16x128xbf16> to vector<8x16x128xbf16>
    %2 = vector.shape_cast %1 : vector<8x16x128xbf16> to vector<128x128xbf16>
    %c0_3 = arith.constant 0 : index
    %c0_4 = arith.constant 0 : index
    %3 = vector.load %arg3[%c0_3, %c0_4] : memref<128x128xbf16, #tpu.memory_space<vmem>>, vector<128x128xbf16>
    %cst = arith.constant dense<0.000000e+00> : vector<128x128xf32>
    %4 = tpu.matmul %2, %3, %cst {dimension_numbers = #tpu.dot_dimension_numbers<[1], [0], [0], [1], [0, 0, 1, 1], [], []>} : vector<128x128xbf16>, vector<128x128xbf16>, vector<128x128xf32> -> vector<128x128xf32>
    %c0_5 = arith.constant 0 : index
    %c0_6 = arith.constant 0 : index
    %5 = vector.load %arg4[%c0_5, %c0_6] : memref<1x128xf32, #tpu.memory_space<vmem>>, vector<1x128xf32>
    %6 = vector.broadcast %5 : vector<1x128xf32> to vector<128x128xf32>
    %7 = arith.addf %4, %6 : vector<128x128xf32>
    %cst_7 = arith.constant 0.000000e+00 : f32
    %8 = vector.broadcast %cst_7 : f32 to vector<128x128xf32>
    %9 = arith.maximumf %7, %8 : vector<128x128xf32>
    %10 = vector.shape_cast %9 : vector<128x128xf32> to vector<8x16x128xf32>
    %11 = arith.truncf %10 : vector<8x16x128xf32> to vector<8x16x128xbf16>
    %c0_8 = arith.constant 0 : index
    %c0_9 = arith.constant 0 : index
    %c0_10 = arith.constant 0 : index
    %c0_11 = arith.constant 0 : index
    %12 = vector.load %arg5[%c0_8, %c0_9, %c0_10, %c0_11] : memref<1x8x16x128xbf16, #tpu.memory_space<vmem>>, vector<1x8x16x128xbf16>
    %13 = vector.shape_cast %12 : vector<1x8x16x128xbf16> to vector<8x16x128xbf16>
    %14 = vector.shape_cast %11 : vector<8x16x128xbf16> to vector<1x8x16x128xbf16>
    tpu.vector_store %arg5[%c0_8, %c0_9, %c0_10, %c0_11], %14 {strides = array<i32>} : memref<1x8x16x128xbf16, #tpu.memory_space<vmem>>, vector<1x8x16x128xbf16>,
    return
  }
  func.func @transform_0(%arg0: i32, %arg1: i32) -> (i32, i32, i32, i32) {
    %c0_i32 = arith.constant 0 : i32
    %c0_i32_0 = arith.constant 0 : i32
    %c0_i32_1 = arith.constant 0 : i32
    return %arg0, %arg1, %c0_i32, %c0_i32_0 : i32, i32, i32, i32
  }
  func.func @transform_1(%arg0: i32, %arg1: i32) -> (i32, i32) {
    %c0_i32 = arith.constant 0 : i32
    %c0_i32_0 = arith.constant 0 : i32
    %c0_i32_1 = arith.constant 0 : i32
    return %c0_i32, %c0_i32_0 : i32, i32
  }
  func.func @transform_2(%arg0: i32, %arg1: i32) -> (i32, i32) {
    %c0_i32 = arith.constant 0 : i32
    %c0_i32_0 = arith.constant 0 : i32
    %c0_i32_1 = arith.constant 0 : i32
    return %c0_i32, %c0_i32_0 : i32, i32
  }
  func.func @transform_3(%arg0: i32, %arg1: i32) -> (i32, i32, i32, i32) {
    %c0_i32 = arith.constant 0 : i32
    %c0_i32_0 = arith.constant 0 : i32
    %c0_i32_1 = arith.constant 0 : i32
    return %arg0, %arg1, %c0_i32, %c0_i32_0 : i32, i32, i32, i32
  }
}

</mosaic_0001>

<llo_original>
// kernel: conv_bn_relu.1
$region0: #{conv_bn_relu.1}
  #allocation0 [shape = 'u32[]', space=smem, size = 0x4, offset = 0x4, fixed_abs, tag = 'smem constant byte address 0x4 - core index']
  #allocation1 [shape = 'u32[72,128]{1,0:T(1,128)}', space=vmem, size = 0x9000, scoped, tag = 'internal scratch']
  %s0 = inlined_call_operand.vmem [shape: bf16[2,16,16,128], index: 0, kind: input, shape index: {}]
  %s1 = inlined_call_operand.vmem [shape: bf16[128,128], index: 1, kind: input, shape index: {}]
  %s2 = inlined_call_operand.vmem [shape: f32[1,128], index: 2, kind: input, shape index: {}]
  %s3 = inlined_call_operand.vmem [shape: bf16[2,16,16,128], index: 3, kind: output, shape index: {}]
  %s4 = sld [smem:[#allocation0]]
  $region45: #{conv_bn_relu.1} parent=0
    _
  %s6 = ssub.s32 1, %s4
  %s7 = scalar_select 0, %s6, %s4
  loop: start=0, step=1, limit=6
  $region2: #{conv_bn_relu.1} parent=0 // loop_pre_header
    _
  $region3: #{conv_bn_relu.1} parent=0 // loop_header
    %s9 = sphi 0, %s13
    %p10 = scmp.ge.s32.totalorder %s9, 6
    %s16 = sphi 0, %s28
    %s17 = sphi 0, %s24
    %s18 = sphi 0, %s16
    %s19 = sphi 0, %s17
    %s20 = sphi 0, %s18
    %s21 = sphi 0, %s19
    %s33 = sphi 0, %s35
    %s36 = sphi 0, %s33
    %s37 = sphi 0, %s36
    %s53 = sphi 0, %s37
    %s57 = sphi 0, %s57
    %s59 = sphi 0, %s57
    %s60 = sphi 0, %s59
    %s74 = sphi 0, %s60
    %s78 = sphi 0, %s78
    %s80 = sphi 0, %s78
    %s81 = sphi 0, %s80
    %s95 = sphi 0, %s81
    %s103 = sphi 0, %s105
    %s106 = sphi 0, %s103
    %s107 = sphi 0, %s106
    %s123 = sphi 0, %s107
  $region4: #{conv_bn_relu.1} parent=0 // loop_header_branch
    %12 = sbr.rel (%p10) target = $region8
  $region5: #{conv_bn_relu.1} parent=0 // loop_body
    %s14 = ssub.s32 %s9, 1
    %s15 = ssub.s32 %s9, 2
    %s22 = sadd.s32 1, %s17
    %p23 = scmp.ge.s32.totalorder %s22, 2
    %s24 = scalar_select %p23, 0, %s22
    %s25 = sadd.s32 1, %s16
    %s26 = scalar_select %p23, %s25, %s16
    %p27 = scmp.ge.s32.totalorder %s26, 2
    %s28 = scalar_select %p27, 0, %s26
    %s29 = ssub.s32 %s16, %s28
    %s30 = ssub.s32 %s17, %s24
    %s31 = sor.u32 %s29, %s30
    %p32 = scmp.eq.s32.totalorder %s31, 0
    %s34 = sadd.s32 %s33, 1
    %s35 = scalar_select %p32, %s33, %s34
    %p38 = pneg %p32
    %p39 = scmp.eq.s32.totalorder %s9, 3
    %p40 = por %p38, %p39
    %p41 = scmp.ne.s32.totalorder %s33, %s36
    %p42 = scmp.eq.s32.totalorder %s9, 0
    %p43 = por %p41, %p42
    %p44 = scmp.ne.s32.totalorder %s33, %s36
    %p45 = scmp.eq.s32.totalorder %s14, 3
    %p46 = por %p44, %p45
    %p47 = scmp.ne.s32.totalorder %s36, %s37
    %p48 = scmp.eq.s32.totalorder %s14, 0
    %p49 = por %p47, %p48
    %p50 = scmp.ne.s32.totalorder %s36, %s37
    %p51 = scmp.eq.s32.totalorder %s15, 3
    %p52 = por %p50, %p51
    %p54 = scmp.ne.s32.totalorder %s37, %s53
    %p55 = scmp.eq.s32.totalorder %s15, 0
    %p56 = por %p54, %p55
    %s58 = sadd.s32 %s57, 1
    %p61 = scmp.eq.s32.totalorder %s9, 3
    %p62 = scmp.ne.s32.totalorder %s57, %s59
    %p63 = scmp.eq.s32.totalorder %s9, 0
    %p64 = por %p62, %p63
    %p65 = scmp.ne.s32.totalorder %s57, %s59
    %p66 = scmp.eq.s32.totalorder %s14, 3
    %p67 = por %p65, %p66
    %p68 = scmp.ne.s32.totalorder %s59, %s60
    %p69 = scmp.eq.s32.totalorder %s14, 0
    %p70 = por %p68, %p69
    %p71 = scmp.ne.s32.totalorder %s59, %s60
    %p72 = scmp.eq.s32.totalorder %s15, 3
    %p73 = por %p71, %p72
    %p75 = scmp.ne.s32.totalorder %s60, %s74
    %p76 = scmp.eq.s32.totalorder %s15, 0
    %p77 = por %p75, %p76
    %s79 = sadd.s32 %s78, 1
    %p82 = scmp.eq.s32.totalorder %s9, 3
    %p83 = scmp.ne.s32.totalorder %s78, %s80
    %p84 = scmp.eq.s32.totalorder %s9, 0
    %p85 = por %p83, %p84
    %p86 = scmp.ne.s32.totalorder %s78, %s80
    %p87 = scmp.eq.s32.totalorder %s14, 3
    %p88 = por %p86, %p87
    %p89 = scmp.ne.s32.totalorder %s80, %s81
    %p90 = scmp.eq.s32.totalorder %s14, 0
    %p91 = por %p89, %p90
    %p92 = scmp.ne.s32.totalorder %s80, %s81
    %p93 = scmp.eq.s32.totalorder %s15, 3
    %p94 = por %p92, %p93
    %p96 = scmp.ne.s32.totalorder %s81, %s95
    %p97 = scmp.eq.s32.totalorder %s15, 0
    %p98 = por %p96, %p97
    %s99 = ssub.s32 %s16, %s28
    %s100 = ssub.s32 %s17, %s24
    %s101 = sor.u32 %s99, %s100
    %p102 = scmp.eq.s32.totalorder %s101, 0
    %s104 = sadd.s32 %s103, 1
    %s105 = scalar_select %p102, %s103, %s104
    %p108 = pneg %p102
    %p109 = scmp.eq.s32.totalorder %s9, 3
    %p110 = por %p108, %p109
    %p111 = scmp.ne.s32.totalorder %s103, %s106
    %p112 = scmp.eq.s32.totalorder %s9, 0
    %p113 = por %p111, %p112
    %p114 = scmp.ne.s32.totalorder %s103, %s106
    %p115 = scmp.eq.s32.totalorder %s14, 3
    %p116 = por %p114, %p115
    %p117 = scmp.ne.s32.totalorder %s106, %s107
    %p118 = scmp.eq.s32.totalorder %s14, 0
    %p119 = por %p117, %p118
    %p120 = scmp.ne.s32.totalorder %s106, %s107
    %p121 = scmp.eq.s32.totalorder %s15, 3
    %p122 = por %p120, %p121
    %p124 = scmp.ne.s32.totalorder %s107, %s123
    %p125 = scmp.eq.s32.totalorder %s15, 0
    %p126 = por %p124, %p125
    %p127 = scmp.le.s32.totalorder 1, %s9
    %p128 = scmp.lt.s32.totalorder %s9, 5
    %p129 = pnand %p127, %p128
    %p130 = pneg %p129
    // Predicated region
    $region9: #{conv_bn_relu.1} parent=5 // pred_check
      _
    $region10: #{conv_bn_relu.1} parent=5 // pred_check_branch
      %132 = sbr.rel (%p129) target = $region12
    $region11: #{conv_bn_relu.1} parent=5 // pred_region
      %s133 = ssub.s32 %s9, 1
      // Predicated region
      $region13: #{conv_bn_relu.1} parent=11 // pred_check
        %p134 = pneg %p70
      $region14: #{conv_bn_relu.1} parent=11 // pred_check_branch
        %136 = sbr.rel (%p134) target = $region16
      $region15: #{conv_bn_relu.1} parent=11 // pred_region
        _
      $region16: #{conv_bn_relu.1} parent=11 // pred_fallthru
        _
      // Predicated region
      $region17: #{conv_bn_relu.1} parent=11 // pred_check
        %p137 = pneg %p91
      $region18: #{conv_bn_relu.1} parent=11 // pred_check_branch
        %139 = sbr.rel (%p137) target = $region20
      $region19: #{conv_bn_relu.1} parent=11 // pred_region
        _
      $region20: #{conv_bn_relu.1} parent=11 // pred_fallthru
        _
    $region12: #{conv_bn_relu.1} parent=5 // pred_fallthru
      _
    %p140 = scmp.lt.s32.totalorder %s9, 4
    // Predicated region
    $region21: #{conv_bn_relu.1} parent=5 // pred_check
      %p141 = pneg %p140
    $region22: #{conv_bn_relu.1} parent=5 // pred_check_branch
      %143 = sbr.rel (%p141) target = $region24
    $region23: #{conv_bn_relu.1} parent=5 // pred_region
      // Predicated region
      $region25: #{conv_bn_relu.1} parent=23 // pred_check
        %p144 = pneg %p43
      $region26: #{conv_bn_relu.1} parent=23 // pred_check_branch
        %146 = sbr.rel (%p144) target = $region28
      $region27: #{conv_bn_relu.1} parent=23 // pred_region
        %s147 = smul.u32 8, %s17
        %p148 = scmp.lt.s32.totalorder %s16, 1
        %s149 = scalar_select %p148, %s16, 1
        %p150 = scmp.lt.s32.totalorder %s147, 15
        %s151 = scalar_select %p150, %s147, 15
        %s152 = smul.addr %s151, 2
        %s153 = smul.addr %s149, 32
        %s154 = sadd.s32 %s152, %s153
        %s155 = smul.addr %s154, 4
        %s156 = scalar_lea.vmem %s0, %s155
        %s157 = smul.u32 8, %s17
      $region28: #{conv_bn_relu.1} parent=23 // pred_fallthru
        _
    $region24: #{conv_bn_relu.1} parent=5 // pred_fallthru
      _
    %p158 = scmp.le.s32.totalorder 1, %s9
    %p159 = scmp.lt.s32.totalorder %s9, 5
    %p160 = pnand %p158, %p159
    %p161 = pneg %p160
    // Predicated region
    $region29: #{conv_bn_relu.1} parent=5 // pred_check
      _
    $region30: #{conv_bn_relu.1} parent=5 // pred_check_branch
      %163 = sbr.rel (%p160) target = $region32
    $region31: #{conv_bn_relu.1} parent=5 // pred_region
      %s164 = ssub.s32 %s9, 1
      %s165 = smul.u32 8, %s19
      %p166 = scmp.lt.s32.totalorder %s18, 1
      %s167 = scalar_select %p166, %s18, 1
      %p168 = scmp.lt.s32.totalorder %s165, 15
      %s169 = scalar_select %p168, %s165, 15
      %s170 = smul.addr %s169, 2
      %s171 = smul.addr %s167, 32
      %s172 = sadd.s32 %s170, %s171
      %s173 = smul.addr %s172, 4
      %s174 = scalar_lea.vmem %s0, %s173
      %p175 = pneg %p49
      %p176 = pneg %p46
      %p177 = pneg %p70
      %p178 = pneg %p67
      %p179 = pneg %p91
      %p180 = pneg %p88
      %p181 = pneg %p119
      %p182 = pneg %p116
      %s183 = smul.u32 8, %s19
      %p184 = scmp.lt.s32.totalorder %s18, 1
      %s185 = scalar_select %p184, %s18, 1
      %p186 = scmp.lt.s32.totalorder %s183, 15
      %s187 = scalar_select %p186, %s183, 15
      %s188 = smul.addr %s187, 2
      %s189 = smul.addr %s185, 32
      %s190 = sadd.s32 %s188, %s189
      %s191 = smul.addr %s190, 4
      %s192 = scalar_lea.vmem %s3, %s191
      %s193 = smul.u32 8, %s19
      %p194 = scmp.lt.s32.totalorder %s18, 1
      %s195 = scalar_select %p194, %s18, 1
      %p196 = scmp.lt.s32.totalorder %s193, 15
      %s197 = scalar_select %p196, %s193, 15
      %s198 = smul.addr %s197, 2
      %s199 = smul.addr %s195, 32
      %s200 = sadd.s32 %s198, %s199
      %s201 = smul.addr %s200, 4
      %s202 = scalar_lea.vmem %s0, %s201
      %s203 = smul.u32 8, %s19
      %s204 = smul.u32 8, %s19
      %p205 = scmp.lt.s32.totalorder %s18, 1
      %s206 = scalar_select %p205, %s18, 1
      %p207 = scmp.lt.s32.totalorder %s204, 15
      %s208 = scalar_select %p207, %s204, 15
      %s209 = smul.addr %s208, 2
      %s210 = smul.addr %s206, 32
      %s211 = sadd.s32 %s209, %s210
      %s212 = smul.addr %s211, 4
      %s213 = scalar_lea.vmem %s3, %s212
      %s214 = smul.u32 8, %s19
      %v215 = vld [vmem:[%s202] sm:$0xf]
      %v216 = vld [vmem:[%s202 + $0x4] sm:$0xf]
      %v217 = vld [vmem:[%s202 + $0x8] sm:$0xf]
      %v218 = vld [vmem:[%s202 + $0xc] sm:$0xf]
      %v219 = vld [vmem:[%s202 + $0x10] sm:$0xf]
      %v220 = vld [vmem:[%s202 + $0x14] sm:$0xf]
      %v221 = vld [vmem:[%s202 + $0x18] sm:$0xf]
      %v222 = vld [vmem:[%s202 + $0x1c] sm:$0xf]
      %v223 = vld [vmem:[%s202 + $0x20] sm:$0xf]
      %v224 = vld [vmem:[%s202 + $0x24] sm:$0xf]
      %v225 = vld [vmem:[%s202 + $0x28] sm:$0xf]
      %v226 = vld [vmem:[%s202 + $0x2c] sm:$0xf]
      %v227 = vld [vmem:[%s202 + $0x30] sm:$0xf]
      %v228 = vld [vmem:[%s202 + $0x34] sm:$0xf]
      %v229 = vld [vmem:[%s202 + $0x38] sm:$0xf]
      %v230 = vld [vmem:[%s202 + $0x3c] sm:$0xf]
      %v231 = vld [vmem:[%s1] sm:$0xf]
      %v232 = vld [vmem:[%s1 + $0x4] sm:$0xf]
      %v233 = vld [vmem:[%s1 + $0x8] sm:$0xf]
      %v234 = vld [vmem:[%s1 + $0xc] sm:$0xf]
      %v235 = vld [vmem:[%s1 + $0x10] sm:$0xf]
      %v236 = vld [vmem:[%s1 + $0x14] sm:$0xf]
      %v237 = vld [vmem:[%s1 + $0x18] sm:$0xf]
      %v238 = vld [vmem:[%s1 + $0x1c] sm:$0xf]
      %v239 = vld [vmem:[%s1 + $0x20] sm:$0xf]
      %v240 = vld [vmem:[%s1 + $0x24] sm:$0xf]
      %v241 = vld [vmem:[%s1 + $0x28] sm:$0xf]
      %v242 = vld [vmem:[%s1 + $0x2c] sm:$0xf]
      %v243 = vld [vmem:[%s1 + $0x30] sm:$0xf]
      %v244 = vld [vmem:[%s1 + $0x34] sm:$0xf]
      %v245 = vld [vmem:[%s1 + $0x38] sm:$0xf]
      %v246 = vld [vmem:[%s1 + $0x3c] sm:$0xf]
      %v247 = vld [vmem:[%s2] sm:$0x1]
      %v249 = vperm.slane %v247, 0
      %v267 = vunpack.c.l.b16 %v215
      %v268 = vunpack.c.l.b16 %v216
      %v269 = vunpack.c.l.b16 %v217
      %v270 = vunpack.c.l.b16 %v218
      %v271 = vunpack.c.l.b16 %v219
      %v272 = vunpack.c.l.b16 %v220
      %v273 = vunpack.c.l.b16 %v221
      %v274 = vunpack.c.l.b16 %v222
      %v275 = vunpack.c.l.b16 %v223
      %v276 = vunpack.c.l.b16 %v224
      %v277 = vunpack.c.l.b16 %v225
      %v278 = vunpack.c.l.b16 %v226
      %v279 = vunpack.c.l.b16 %v227
      %v280 = vunpack.c.l.b16 %v228
      %v281 = vunpack.c.l.b16 %v229
      %v282 = vunpack.c.l.b16 %v230
      %v283 = vpack.c.b16 %v268, %v267
      %v284 = vpack.c.b16 %v270, %v269
      %v285 = vpack.c.b16 %v272, %v271
      %v286 = vpack.c.b16 %v274, %v273
      %v287 = vpack.c.b16 %v276, %v275
      %v288 = vpack.c.b16 %v278, %v277
      %v289 = vpack.c.b16 %v280, %v279
      %v290 = vpack.c.b16 %v282, %v281
      %v315 = vunpack.c.l.b16 %v231
      %v316 = vunpack.c.l.b16 %v232
      %v317 = vunpack.c.l.b16 %v233
      %v318 = vunpack.c.l.b16 %v234
      %v319 = vunpack.c.l.b16 %v235
      %v320 = vunpack.c.l.b16 %v236
      %v321 = vunpack.c.l.b16 %v237
      %v322 = vunpack.c.l.b16 %v238
      %v323 = vunpack.c.l.b16 %v239
      %v324 = vunpack.c.l.b16 %v240
      %v325 = vunpack.c.l.b16 %v241
      %v326 = vunpack.c.l.b16 %v242
      %v327 = vunpack.c.l.b16 %v243
      %v328 = vunpack.c.l.b16 %v244
      %v329 = vunpack.c.l.b16 %v245
      %v330 = vunpack.c.l.b16 %v246
      %v331 = vpack.c.b16 %v316, %v315
      %v332 = vpack.c.b16 %v318, %v317
      %v333 = vpack.c.b16 %v320, %v319
      %v334 = vpack.c.b16 %v322, %v321
      %v335 = vpack.c.b16 %v324, %v323
      %v336 = vpack.c.b16 %v326, %v325
      %v337 = vpack.c.b16 %v328, %v327
      %v338 = vpack.c.b16 %v330, %v329
      %347 = vmatpush.bf16.msra.mxu0 %v338
      %348 = vmatpush.bf16.msra.mxu0 %v337
      %349 = vmatpush.bf16.msra.mxu0 %v336
      %350 = vmatpush.bf16.msra.mxu0 %v335
      %351 = vmatpush.bf16.msra.mxu0 %v334
      %352 = vmatpush.bf16.msra.mxu0 %v333
      %353 = vmatpush.bf16.msra.mxu0 %v332
      %354 = vmatpush.bf16.msra.mxu0 %v331
      %355 = vmatmul.bf16.gmra.mxu0 %v283
      %v356 = vpop.f32.mrf.mxu0
      %v357 = vadd.f32 %v249, %v356
      %v358 = vpop.f32.mrf.mxu0
      %v359 = vadd.f32 %v249, %v358
      %360 = vmatmul.bf16.gmra.mxu0 %v284
      %v361 = vpop.f32.mrf.mxu0
      %v362 = vadd.f32 %v249, %v361
      %v363 = vpop.f32.mrf.mxu0
      %v364 = vadd.f32 %v249, %v363
      %365 = vmatmul.bf16.gmra.mxu0 %v285
      %v366 = vpop.f32.mrf.mxu0
      %v367 = vadd.f32 %v249, %v366
      %v368 = vpop.f32.mrf.mxu0
      %v369 = vadd.f32 %v249, %v368
      %370 = vmatmul.bf16.gmra.mxu0 %v286
      %v371 = vpop.f32.mrf.mxu0
      %v372 = vadd.f32 %v249, %v371
      %v373 = vpop.f32.mrf.mxu0
      %v374 = vadd.f32 %v249, %v373
      %375 = vmatmul.bf16.gmra.mxu0 %v287
      %v376 = vpop.f32.mrf.mxu0
      %v377 = vadd.f32 %v249, %v376
      %v378 = vpop.f32.mrf.mxu0
      %v379 = vadd.f32 %v249, %v378
      %380 = vmatmul.bf16.gmra.mxu0 %v288
      %v381 = vpop.f32.mrf.mxu0
      %v382 = vadd.f32 %v249, %v381
      %v383 = vpop.f32.mrf.mxu0
      %v384 = vadd.f32 %v249, %v383
      %385 = vmatmul.bf16.gmra.mxu0 %v289
      %v386 = vpop.f32.mrf.mxu0
      %v387 = vadd.f32 %v249, %v386
      %v388 = vpop.f32.mrf.mxu0
      %v389 = vadd.f32 %v249, %v388
      %390 = vmatmul.bf16.gmra.mxu0 %v290
      %v391 = vpop.f32.mrf.mxu0
      %v392 = vadd.f32 %v249, %v391
      %v393 = vpop.f32.mrf.mxu0
      %v394 = vadd.f32 %v249, %v393
      %395 = vdwg.mxu0
      %v396 = vmax.f32 %v357, 0.0
      %v397 = vmax.f32 %v359, 0.0
      %v398 = vmax.f32 %v362, 0.0
      %v399 = vmax.f32 %v364, 0.0
      %v400 = vmax.f32 %v367, 0.0
      %v401 = vmax.f32 %v369, 0.0
      %v402 = vmax.f32 %v372, 0.0
      %v403 = vmax.f32 %v374, 0.0
      %v404 = vmax.f32 %v377, 0.0
      %v405 = vmax.f32 %v379, 0.0
      %v406 = vmax.f32 %v382, 0.0
      %v407 = vmax.f32 %v384, 0.0
      %v408 = vmax.f32 %v387, 0.0
      %v409 = vmax.f32 %v389, 0.0
      %v410 = vmax.f32 %v392, 0.0
      %v411 = vmax.f32 %v394, 0.0
      %v412 = vpack.c.bf16 %v396, %v396
      %v413 = vpack.c.bf16 %v397, %v397
      %v414 = vpack.c.bf16 %v398, %v398
      %v415 = vpack.c.bf16 %v399, %v399
      %v416 = vpack.c.bf16 %v400, %v400
      %v417 = vpack.c.bf16 %v401, %v401
      %v418 = vpack.c.bf16 %v402, %v402
      %v419 = vpack.c.bf16 %v403, %v403
      %v420 = vpack.c.bf16 %v404, %v404
      %v421 = vpack.c.bf16 %v405, %v405
      %v422 = vpack.c.bf16 %v406, %v406
      %v423 = vpack.c.bf16 %v407, %v407
      %v424 = vpack.c.bf16 %v408, %v408
      %v425 = vpack.c.bf16 %v409, %v409
      %v426 = vpack.c.bf16 %v410, %v410
      %v427 = vpack.c.bf16 %v411, %v411
      %428 = vst [vmem:[%s213] sm:$0xf] %v412
      %429 = vst [vmem:[%s213 + $0x4] sm:$0xf] %v413
      %430 = vst [vmem:[%s213 + $0x8] sm:$0xf] %v414
      %431 = vst [vmem:[%s213 + $0xc] sm:$0xf] %v415
      %432 = vst [vmem:[%s213 + $0x10] sm:$0xf] %v416
      %433 = vst [vmem:[%s213 + $0x14] sm:$0xf] %v417
      %434 = vst [vmem:[%s213 + $0x18] sm:$0xf] %v418
      %435 = vst [vmem:[%s213 + $0x1c] sm:$0xf] %v419
      %436 = vst [vmem:[%s213 + $0x20] sm:$0xf] %v420
      %437 = vst [vmem:[%s213 + $0x24] sm:$0xf] %v421
      %438 = vst [vmem:[%s213 + $0x28] sm:$0xf] %v422
      %439 = vst [vmem:[%s213 + $0x2c] sm:$0xf] %v423
      %440 = vst [vmem:[%s213 + $0x30] sm:$0xf] %v424
      %441 = vst [vmem:[%s213 + $0x34] sm:$0xf] %v425
      %442 = vst [vmem:[%s213 + $0x38] sm:$0xf] %v426
      %443 = vst [vmem:[%s213 + $0x3c] sm:$0xf] %v427
      %s444 = smul.u32 8, %s19
      %p445 = scmp.lt.s32.totalorder %s18, 1
      %s446 = scalar_select %p445, %s18, 1
      %p447 = scmp.lt.s32.totalorder %s444, 15
      %s448 = scalar_select %p447, %s444, 15
      %s449 = smul.addr %s448, 2
      %s450 = smul.addr %s446, 32
      %s451 = sadd.s32 %s449, %s450
      %s452 = smul.addr %s451, 4
      %s453 = scalar_lea.vmem %s3, %s452
      // Predicated region
      $region33: #{conv_bn_relu.1} parent=31 // pred_check
        %p454 = pneg %p116
      $region34: #{conv_bn_relu.1} parent=31 // pred_check_branch
        %456 = sbr.rel (%p454) target = $region36
      $region35: #{conv_bn_relu.1} parent=31 // pred_region
        %s457 = smul.u32 8, %s19
      $region36: #{conv_bn_relu.1} parent=31 // pred_fallthru
        _
    $region32: #{conv_bn_relu.1} parent=5 // pred_fallthru
      _
    %p458 = scmp.le.s32.totalorder 2, %s9
    // Predicated region
    $region37: #{conv_bn_relu.1} parent=5 // pred_check
      %p459 = pneg %p458
    $region38: #{conv_bn_relu.1} parent=5 // pred_check_branch
      %461 = sbr.rel (%p459) target = $region40
    $region39: #{conv_bn_relu.1} parent=5 // pred_region
      %s462 = ssub.s32 %s9, 2
      // Predicated region
      $region41: #{conv_bn_relu.1} parent=39 // pred_check
        %p463 = pneg %p122
      $region42: #{conv_bn_relu.1} parent=39 // pred_check_branch
        %465 = sbr.rel (%p463) target = $region44
      $region43: #{conv_bn_relu.1} parent=39 // pred_region
        %s466 = smul.u32 8, %s21
        %p467 = scmp.lt.s32.totalorder %s20, 1
        %s468 = scalar_select %p467, %s20, 1
        %p469 = scmp.lt.s32.totalorder %s466, 15
        %s470 = scalar_select %p469, %s466, 15
        %s471 = smul.addr %s470, 2
        %s472 = smul.addr %s468, 32
        %s473 = sadd.s32 %s471, %s472
        %s474 = smul.addr %s473, 4
        %s475 = scalar_lea.vmem %s3, %s474
      $region44: #{conv_bn_relu.1} parent=39 // pred_fallthru
        _
    $region40: #{conv_bn_relu.1} parent=5 // pred_fallthru
      _
  $region6: #{conv_bn_relu.1} parent=0 // loop_footer
    %s13 = sadd.s32 1, %s9
  $region7: #{conv_bn_relu.1} parent=0 // loop_footer_branch
    %8 = sbr.rel target = $region3
  $region8: #{conv_bn_relu.1} parent=0 // loop_exit
    _

</llo_original>
